<compile_context>
chip_gen: v5e
topology: v5e:2x2
jax: 0.10.0
libtpu: 0.0.40
codegen_flags: <defaults>
</compile_context>

<pallas_src>
import math

import jax
import jax.numpy as jnp
from jax import lax
from jax.experimental import pallas as pl
from jax.experimental.pallas import tpu as pltpu


def actor_kernel(x_ref,                         # (block_b, D) observations, natural layout
                 w1_ref, b1_ref,                # (H1, D), (H1, 1)
                 w2_ref, b2_ref,                # (H2, H1), (H2, 1)
                 w3_ref, b3_ref,                # (A, H2), (A, 1)
                 probs_ref):                    # out: (A, block_b) f32, batch on lanes
    x = x_ref[...]                                                    # (block_b, D)

    # W1 (H1, D) contracted with x (block_b, D) over D -> (H1, block_b):
    # batch lands on the 128-lane axis with no wrapper-side transpose.
    h1 = lax.dot_general(w1_ref[...], x, (((1,), (1,)), ((), ())),
                         preferred_element_type=jnp.float32)
    h1 = jnp.maximum(h1 + b1_ref[...], 0.0)                           # (H1, block_b)

    h2 = jnp.dot(w2_ref[...], h1, preferred_element_type=jnp.float32)
    h2 = jnp.maximum(h2 + b2_ref[...], 0.0)                           # (H2, block_b)

    logits = jnp.dot(w3_ref[...], h2, preferred_element_type=jnp.float32)
    logits = logits + b3_ref[...]                                     # (A, block_b)

    # Numerically stable softmax over the action (sublane) axis, per column.
    # (torch's Softmax(dim=0) on a 1-D observation == softmax over actions.)
    m = jnp.max(logits, axis=0, keepdims=True)                        # (1, block_b)
    e = jnp.exp(logits - m)                                           # (A, block_b)
    denom = jnp.sum(e, axis=0, keepdims=True)                         # (1, block_b)
    probs_ref[...] = e / denom                                        # exact normalization


def _round_up(x, m):
    return ((x + m - 1) // m) * m


def actor_probs_t(obs, params, *, block_b=None, min_tiles=1):
    """obs: (B, input_dims) -> probs (n_actions, B) f32 (batch on the lane axis).

    min_tiles: set to 2 on v7x so both TensorCores receive a "parallel" tile.
    """
    w1, b1, w2, b2, w3, b3 = params
    n_actions = w3.shape[0]
    in_dims = w1.shape[1]
    B = obs.shape[0]

    x = obs if obs.dtype == jnp.float32 else obs.astype(jnp.float32)

    if block_b is None:
        # Few, large tiles: grid-step fixed cost dominates this tiny network.
        per_tile = pl.cdiv(B, max(min_tiles, 1))
        block_b = min(_round_up(max(per_tile, 1), 128), 512)

    grid = (pl.cdiv(B, block_b),)
    const = lambda i: (0, 0)                    # weights/biases: one resident block

    probs_t = pl.pallas_call(
        actor_kernel,
        out_shape=jax.ShapeDtypeStruct((n_actions, B), jnp.float32),
        grid_spec=pltpu.PrefetchScalarGridSpec(
            num_scalar_prefetch=0,
            grid=grid,
            in_specs=[
                pl.BlockSpec((block_b, in_dims), lambda i: (i, 0)),
                pl.BlockSpec(w1.shape, const),
                pl.BlockSpec(b1.shape, const),
                pl.BlockSpec(w2.shape, const),
                pl.BlockSpec(b2.shape, const),
                pl.BlockSpec(w3.shape, const),
                pl.BlockSpec(b3.shape, const),
            ],
            out_specs=pl.BlockSpec((n_actions, block_b), lambda i: (0, i)),
        ),
        compiler_params=pltpu.CompilerParams(
            dimension_semantics=("parallel",)),  # v7x: shard batch tiles over 2 TCs
    )(x, w1, b1, w2, b2, w3, b3)
    return probs_t


def actor_forward(obs, params, **kw):
    """PyTorch-facing layout (B, n_actions). Prefer actor_probs_t downstream to
    avoid this extra wrapper transpose."""
    return actor_probs_t(obs, params, **kw).T


def actor_forward_single(obs_1d, params):
    """Exact analogue of the PyTorch 1-D usage (Softmax(dim=0) on a single obs)."""
    return actor_probs_t(obs_1d[None, :], params)[:, 0]


def sample_actions(key, probs_t):
    """Categorical sample per observation column from (n_actions, B) probs."""
    return jax.random.categorical(key, jnp.log(probs_t), axis=0)


def actor_forward_ref(obs, params):
    """Pure-JAX reference of the PyTorch module (probabilities, (B, n_actions))."""
    w1, b1, w2, b2, w3, b3 = params
    h1 = jnp.maximum(obs @ w1.T + b1[:, 0], 0.0)
    h2 = jnp.maximum(h1 @ w2.T + b2[:, 0], 0.0)
    logits = h2 @ w3.T + b3[:, 0]
    return jax.nn.softmax(logits, axis=-1)


def init_linear(key, fan_in, fan_out):
    """PyTorch nn.Linear default init, torch layout: W (out, in), b (out, 1)."""
    kw, kb = jax.random.split(key)
    bound = 1.0 / math.sqrt(fan_in)
    w = jax.random.uniform(kw, (fan_out, fan_in), jnp.float32, -bound, bound)
    b = jax.random.uniform(kb, (fan_out, 1), jnp.float32, -bound, bound)
    return w, b


if __name__ == "__main__":
    # ActorNetwork(lr, (input_dims,), fc1_dims, fc2_dims, n_actions), batched envs.
    input_dims, fc1_dims, fc2_dims, n_actions = 8, 32, 32, 4
    batch = 256

    key = jax.random.PRNGKey(0)
    k_obs, k1, k2, k3, k_act = jax.random.split(key, 5)
    w1, b1 = init_linear(k1, input_dims, fc1_dims)
    w2, b2 = init_linear(k2, fc1_dims, fc2_dims)
    w3, b3 = init_linear(k3, fc2_dims, n_actions)
    params = (w1, b1, w2, b2, w3, b3)

    obs = jax.random.normal(k_obs, (batch, input_dims), jnp.float32)
    ref = actor_forward_ref(obs, params)                      # (B, A)

    # Batched path: single grid step for the whole batch (block_b=256).
    actor_step = jax.jit(actor_probs_t)
    probs_t = jax.block_until_ready(actor_step(obs, params))  # (A, B)
    assert probs_t.shape == (n_actions, batch)
    assert bool(jnp.all(probs_t >= 0.0))
    assert bool(jnp.allclose(jnp.sum(probs_t, axis=0), 1.0, atol=1e-3))
    assert bool(jnp.allclose(probs_t.T, ref, atol=2e-3))

    actions = jax.block_until_ready(sample_actions(k_act, probs_t))
    assert actions.shape == (batch,)
    assert bool(jnp.all((actions >= 0) & (actions < n_actions)))

    # Ragged batch (exercises the boundary tile: B not a multiple of 128, no padding op).
    obs_ragged = obs[:200]
    probs_r = jax.block_until_ready(jax.jit(actor_probs_t)(obs_ragged, params))
    assert probs_r.shape == (n_actions, 200)
    assert bool(jnp.allclose(probs_r.T, ref[:200], atol=2e-3))

    # Single 1-D observation path (literal PyTorch usage, Softmax(dim=0)).
    p1 = jax.block_until_ready(actor_forward_single(obs[0], params))
    assert p1.shape == (n_actions,)
    assert bool(jnp.allclose(p1, ref[0], atol=2e-3))

    print("KERNEL_OK")
</pallas_src>

<mosaic_0001>
module attributes {stable_mosaic.version = 11 : i64} {
  func.func @actor_kernel(%arg0: i32, %arg1: memref<256x8xf32, #tpu.memory_space<vmem>>, %arg2: memref<32x8xf32, #tpu.memory_space<vmem>>, %arg3: memref<32x1xf32, #tpu.memory_space<vmem>>, %arg4: memref<32x32xf32, #tpu.memory_space<vmem>>, %arg5: memref<32x1xf32, #tpu.memory_space<vmem>>, %arg6: memref<4x32xf32, #tpu.memory_space<vmem>>, %arg7: memref<4x1xf32, #tpu.memory_space<vmem>>, %arg8: memref<4x256xf32, #tpu.memory_space<vmem>>) attributes {dimension_semantics = [#tpu.dimension_semantics<parallel>], iteration_bounds = array<i64: 1>, scalar_prefetch = 0 : i64, scratch_operands = 0 : i64, tpu.core_type = #tpu.core_type<tc>, window_params = [{transform_indices = @transform_0, window_bounds = array<i64: 256, 8>}, {pipeline_mode = #tpu.pipeline_mode<synchronous>, transform_indices = @transform_1, window_bounds = array<i64: 32, 8>}, {pipeline_mode = #tpu.pipeline_mode<synchronous>, transform_indices = @transform_2, window_bounds = array<i64: 32, 1>}, {pipeline_mode = #tpu.pipeline_mode<synchronous>, transform_indices = @transform_3, window_bounds = array<i64: 32, 32>}, {pipeline_mode = #tpu.pipeline_mode<synchronous>, transform_indices = @transform_4, window_bounds = array<i64: 32, 1>}, {pipeline_mode = #tpu.pipeline_mode<synchronous>, transform_indices = @transform_5, window_bounds = array<i64: 4, 32>}, {pipeline_mode = #tpu.pipeline_mode<synchronous>, transform_indices = @transform_6, window_bounds = array<i64: 4, 1>}, {transform_indices = @transform_7, window_bounds = array<i64: 4, 256>}]} {
    %c0 = arith.constant 0 : index
    %c0_0 = arith.constant 0 : index
    %0 = vector.load %arg1[%c0, %c0_0] : memref<256x8xf32, #tpu.memory_space<vmem>>, vector<256x8xf32>
    %c0_1 = arith.constant 0 : index
    %c0_2 = arith.constant 0 : index
    %1 = vector.load %arg2[%c0_1, %c0_2] : memref<32x8xf32, #tpu.memory_space<vmem>>, vector<32x8xf32>
    %cst = arith.constant dense<0.000000e+00> : vector<32x256xf32>
    %2 = tpu.matmul %1, %0, %cst {dimension_numbers = #tpu.dot_dimension_numbers<[1], [1], [0], [0], [0, 0, 1, 0], [], []>} : vector<32x8xf32>, vector<256x8xf32>, vector<32x256xf32> -> vector<32x256xf32>
    %c0_3 = arith.constant 0 : index
    %c0_4 = arith.constant 0 : index
    %3 = vector.load %arg3[%c0_3, %c0_4] : memref<32x1xf32, #tpu.memory_space<vmem>>, vector<32x1xf32>
    %4 = vector.broadcast %3 : vector<32x1xf32> to vector<32x256xf32>
    %5 = arith.addf %2, %4 : vector<32x256xf32>
    %cst_5 = arith.constant 0.000000e+00 : f32
    %6 = vector.broadcast %cst_5 : f32 to vector<32x256xf32>
    %7 = arith.maximumf %5, %6 : vector<32x256xf32>
    %c0_6 = arith.constant 0 : index
    %c0_7 = arith.constant 0 : index
    %8 = vector.load %arg4[%c0_6, %c0_7] : memref<32x32xf32, #tpu.memory_space<vmem>>, vector<32x32xf32>
    %cst_8 = arith.constant dense<0.000000e+00> : vector<32x256xf32>
    %9 = tpu.matmul %8, %7, %cst_8 {dimension_numbers = #tpu.dot_dimension_numbers<[1], [0], [0], [1], [0, 0, 1, 1], [], []>} : vector<32x32xf32>, vector<32x256xf32>, vector<32x256xf32> -> vector<32x256xf32>
    %c0_9 = arith.constant 0 : index
    %c0_10 = arith.constant 0 : index
    %10 = vector.load %arg5[%c0_9, %c0_10] : memref<32x1xf32, #tpu.memory_space<vmem>>, vector<32x1xf32>
    %11 = vector.broadcast %10 : vector<32x1xf32> to vector<32x256xf32>
    %12 = arith.addf %9, %11 : vector<32x256xf32>
    %cst_11 = arith.constant 0.000000e+00 : f32
    %13 = vector.broadcast %cst_11 : f32 to vector<32x256xf32>
    %14 = arith.maximumf %12, %13 : vector<32x256xf32>
    %c0_12 = arith.constant 0 : index
    %c0_13 = arith.constant 0 : index
    %15 = vector.load %arg6[%c0_12, %c0_13] : memref<4x32xf32, #tpu.memory_space<vmem>>, vector<4x32xf32>
    %cst_14 = arith.constant dense<0.000000e+00> : vector<4x256xf32>
    %16 = tpu.matmul %15, %14, %cst_14 {dimension_numbers = #tpu.dot_dimension_numbers<[1], [0], [0], [1], [0, 0, 1, 1], [], []>} : vector<4x32xf32>, vector<32x256xf32>, vector<4x256xf32> -> vector<4x256xf32>
    %c0_15 = arith.constant 0 : index
    %c0_16 = arith.constant 0 : index
    %17 = vector.load %arg7[%c0_15, %c0_16] : memref<4x1xf32, #tpu.memory_space<vmem>>, vector<4x1xf32>
    %18 = vector.broadcast %17 : vector<4x1xf32> to vector<4x256xf32>
    %19 = arith.addf %16, %18 : vector<4x256xf32>
    %cst_17 = arith.constant dense<0xFF800000> : vector<256xf32>
    %20 = vector.multi_reduction <maximumf>, %19, %cst_17 [0] : vector<4x256xf32> to vector<256xf32>
    %21 = vector.shape_cast %20 : vector<256xf32> to vector<1x256xf32>
    %22 = vector.broadcast %21 : vector<1x256xf32> to vector<4x256xf32>
    %23 = arith.subf %19, %22 : vector<4x256xf32>
    %24 = math.exp %23 : vector<4x256xf32>
    %cst_18 = arith.constant dense<0.000000e+00> : vector<256xf32>
    %25 = vector.multi_reduction <add>, %24, %cst_18 [0] : vector<4x256xf32> to vector<256xf32>
    %26 = vector.shape_cast %25 : vector<256xf32> to vector<1x256xf32>
    %27 = vector.broadcast %26 : vector<1x256xf32> to vector<4x256xf32>
    %28 = arith.divf %24, %27 : vector<4x256xf32>
    %c0_19 = arith.constant 0 : index
    %c0_20 = arith.constant 0 : index
    %29 = vector.load %arg8[%c0_19, %c0_20] : memref<4x256xf32, #tpu.memory_space<vmem>>, vector<4x256xf32>
    tpu.vector_store %arg8[%c0_19, %c0_20], %28 {strides = array<i32>} : memref<4x256xf32, #tpu.memory_space<vmem>>, vector<4x256xf32>,
    return
  }
  func.func @transform_0(%arg0: i32) -> (i32, i32) {
    %c0_i32 = arith.constant 0 : i32
    %c0_i32_0 = arith.constant 0 : i32
    return %arg0, %c0_i32 : i32, i32
  }
  func.func @transform_1(%arg0: i32) -> (i32, i32) {
    %c0_i32 = arith.constant 0 : i32
    %c0_i32_0 = arith.constant 0 : i32
    %c0_i32_1 = arith.constant 0 : i32
    return %c0_i32, %c0_i32_0 : i32, i32
  }
  func.func @transform_2(%arg0: i32) -> (i32, i32) {
    %c0_i32 = arith.constant 0 : i32
    %c0_i32_0 = arith.constant 0 : i32
    %c0_i32_1 = arith.constant 0 : i32
    return %c0_i32, %c0_i32_0 : i32, i32
  }
  func.func @transform_3(%arg0: i32) -> (i32, i32) {
    %c0_i32 = arith.constant 0 : i32
    %c0_i32_0 = arith.constant 0 : i32
    %c0_i32_1 = arith.constant 0 : i32
    return %c0_i32, %c0_i32_0 : i32, i32
  }
  func.func @transform_4(%arg0: i32) -> (i32, i32) {
    %c0_i32 = arith.constant 0 : i32
    %c0_i32_0 = arith.constant 0 : i32
    %c0_i32_1 = arith.constant 0 : i32
    return %c0_i32, %c0_i32_0 : i32, i32
  }
  func.func @transform_5(%arg0: i32) -> (i32, i32) {
    %c0_i32 = arith.constant 0 : i32
    %c0_i32_0 = arith.constant 0 : i32
    %c0_i32_1 = arith.constant 0 : i32
    return %c0_i32, %c0_i32_0 : i32, i32
  }
  func.func @transform_6(%arg0: i32) -> (i32, i32) {
    %c0_i32 = arith.constant 0 : i32
    %c0_i32_0 = arith.constant 0 : i32
    %c0_i32_1 = arith.constant 0 : i32
    return %c0_i32, %c0_i32_0 : i32, i32
  }
  func.func @transform_7(%arg0: i32) -> (i32, i32) {
    %c0_i32 = arith.constant 0 : i32
    %c0_i32_0 = arith.constant 0 : i32
    return %c0_i32, %arg0 : i32, i32
  }
}

</mosaic_0001>

<llo_original>
// kernel: actor_probs_t.1
$region0: #{actor_probs_t.1}
  #allocation0 [shape = 'u32[]', space=smem, size = 0x4, offset = 0x4, fixed_abs, tag = 'smem constant byte address 0x4 - core index']
  #allocation1 [shape = 'u32[72,128]{1,0:T(1,128)}', space=vmem, size = 0x9000, scoped, tag = 'internal scratch']
  %s0 = inlined_call_operand.vmem [shape: f32[256,8], index: 0, kind: input, shape index: {}]
  %s1 = inlined_call_operand.vmem [shape: f32[32,8], index: 1, kind: input, shape index: {}]
  %s2 = inlined_call_operand.vmem [shape: f32[32,1], index: 2, kind: input, shape index: {}]
  %s3 = inlined_call_operand.vmem [shape: f32[32,32], index: 3, kind: input, shape index: {}]
  %s4 = inlined_call_operand.vmem [shape: f32[32,1], index: 4, kind: input, shape index: {}]
  %s5 = inlined_call_operand.vmem [shape: f32[4,32], index: 5, kind: input, shape index: {}]
  %s6 = inlined_call_operand.vmem [shape: f32[4,1], index: 6, kind: input, shape index: {}]
  %s7 = inlined_call_operand.hbm [shape: f32[4,256], index: 7, kind: output, shape index: {}]
  %s8 = sld [smem:[#allocation0]]
  $region38: #{actor_probs_t.1} parent=0
    _
  %s10 = ssub.s32 1, %s8
  %s11 = scalar_select 0, %s10, %s8
  $region1: #{actor_probs_t.1} parent=0
    #allocation2 [shape = 'u8[4096]{0}', space=vmem, size = 0x1000, scoped, tag = 'output window, operand 0, single buffered']
    #allocation3 [shape = 's32[1]{0}', space=sflag, size = 0x4, scoped, tag = 'scoped memory for actor_probs_t.1']
    %12 = vsyncpa [#allocation3], 0
    // Predicated region
    $region2: #{actor_probs_t.1} parent=1 // pred_check
      _
    $region3: #{actor_probs_t.1} parent=1 // pred_check_branch
      %14 = sbr.rel (0) target = $region5
    $region4: #{actor_probs_t.1} parent=1 // pred_region
      _
    $region5: #{actor_probs_t.1} parent=1 // pred_fallthru
      _
    // Predicated region
    $region6: #{actor_probs_t.1} parent=1 // pred_check
      _
    $region7: #{actor_probs_t.1} parent=1 // pred_check_branch
      %16 = sbr.rel (0) target = $region9
    $region8: #{actor_probs_t.1} parent=1 // pred_region
      _
    $region9: #{actor_probs_t.1} parent=1 // pred_fallthru
      _
    // Predicated region
    $region10: #{actor_probs_t.1} parent=1 // pred_check
      _
    $region11: #{actor_probs_t.1} parent=1 // pred_check_branch
      %18 = sbr.rel (0) target = $region13
    $region12: #{actor_probs_t.1} parent=1 // pred_region
      _
    $region13: #{actor_probs_t.1} parent=1 // pred_fallthru
      _
    // Predicated region
    $region14: #{actor_probs_t.1} parent=1 // pred_check
      _
    $region15: #{actor_probs_t.1} parent=1 // pred_check_branch
      %20 = sbr.rel (0) target = $region17
    $region16: #{actor_probs_t.1} parent=1 // pred_region
      _
    $region17: #{actor_probs_t.1} parent=1 // pred_fallthru
      _
    // Predicated region
    $region18: #{actor_probs_t.1} parent=1 // pred_check
      _
    $region19: #{actor_probs_t.1} parent=1 // pred_check_branch
      %22 = sbr.rel (0) target = $region21
    $region20: #{actor_probs_t.1} parent=1 // pred_region
      _
    $region21: #{actor_probs_t.1} parent=1 // pred_fallthru
      _
    // Predicated region
    $region22: #{actor_probs_t.1} parent=1 // pred_check
      _
    $region23: #{actor_probs_t.1} parent=1 // pred_check_branch
      %24 = sbr.rel (0) target = $region25
    $region24: #{actor_probs_t.1} parent=1 // pred_region
      _
    $region25: #{actor_probs_t.1} parent=1 // pred_fallthru
      _
    // Predicated region
    $region26: #{actor_probs_t.1} parent=1 // pred_check
      _
    $region27: #{actor_probs_t.1} parent=1 // pred_check_branch
      %26 = sbr.rel (0) target = $region29
    $region28: #{actor_probs_t.1} parent=1 // pred_region
      _
    $region29: #{actor_probs_t.1} parent=1 // pred_fallthru
      _
    %v27 = vld [vmem:[%s0] sm:$0xff]
    %v28 = vld [vmem:[%s0 + $0x8] sm:$0xff]
    %v29 = vld [vmem:[%s0 + $0x10] sm:$0xff]
    %v30 = vld [vmem:[%s0 + $0x18] sm:$0xff]
    %v31 = vld [vmem:[%s0 + $0x20] sm:$0xff]
    %v32 = vld [vmem:[%s0 + $0x28] sm:$0xff]
    %v33 = vld [vmem:[%s0 + $0x30] sm:$0xff]
    %v34 = vld [vmem:[%s0 + $0x38] sm:$0xff]
    %v35 = vld [vmem:[%s0 + $0x40] sm:$0xff]
    %v36 = vld [vmem:[%s0 + $0x48] sm:$0xff]
    %v37 = vld [vmem:[%s0 + $0x50] sm:$0xff]
    %v38 = vld [vmem:[%s0 + $0x58] sm:$0xff]
    %v39 = vld [vmem:[%s0 + $0x60] sm:$0xff]
    %v40 = vld [vmem:[%s0 + $0x68] sm:$0xff]
    %v41 = vld [vmem:[%s0 + $0x70] sm:$0xff]
    %v42 = vld [vmem:[%s0 + $0x78] sm:$0xff]
    %v43 = vld [vmem:[%s0 + $0x80] sm:$0xff]
    %v44 = vld [vmem:[%s0 + $0x88] sm:$0xff]
    %v45 = vld [vmem:[%s0 + $0x90] sm:$0xff]
    %v46 = vld [vmem:[%s0 + $0x98] sm:$0xff]
    %v47 = vld [vmem:[%s0 + $0xa0] sm:$0xff]
    %v48 = vld [vmem:[%s0 + $0xa8] sm:$0xff]
    %v49 = vld [vmem:[%s0 + $0xb0] sm:$0xff]
    %v50 = vld [vmem:[%s0 + $0xb8] sm:$0xff]
    %v51 = vld [vmem:[%s0 + $0xc0] sm:$0xff]
    %v52 = vld [vmem:[%s0 + $0xc8] sm:$0xff]
    %v53 = vld [vmem:[%s0 + $0xd0] sm:$0xff]
    %v54 = vld [vmem:[%s0 + $0xd8] sm:$0xff]
    %v55 = vld [vmem:[%s0 + $0xe0] sm:$0xff]
    %v56 = vld [vmem:[%s0 + $0xe8] sm:$0xff]
    %v57 = vld [vmem:[%s0 + $0xf0] sm:$0xff]
    %v58 = vld [vmem:[%s0 + $0xf8] sm:$0xff]
    %v59 = vld [vmem:[%s1] sm:$0xff]
    %v60 = vld [vmem:[%s1 + $0x8] sm:$0xff]
    %v61 = vld [vmem:[%s1 + $0x10] sm:$0xff]
    %v62 = vld [vmem:[%s1 + $0x18] sm:$0xff]
    %v63 = vld [vmem:[%s2] sm:$0xff]
    %v64 = vld [vmem:[%s2 + $0x8] sm:$0xff]
    %v65 = vld [vmem:[%s2 + $0x10] sm:$0xff]
    %v66 = vld [vmem:[%s2 + $0x18] sm:$0xff]
    %68 = vset.pattern.permute.xlu0 0
    %69 = vperm.xlu0 %68, %v63
    %v70 = vpop.permute.xlu0 %69
    %73 = vset.pattern.permute.xlu0 0
    %74 = vperm.xlu0 %73, %v64
    %v75 = vpop.permute.xlu0 %74
    %78 = vset.pattern.permute.xlu0 0
    %79 = vperm.xlu0 %78, %v65
    %v80 = vpop.permute.xlu0 %79
    %83 = vset.pattern.permute.xlu0 0
    %84 = vperm.xlu0 %83, %v66
    %v85 = vpop.permute.xlu0 %84
    %vm87 = vcmask 64512
    %v89 = vsel %vm87, %v59, 0
    %v92 = vsel %vm87, %v60, 0
    %v95 = vsel %vm87, %v61, 0
    %v98 = vsel %vm87, %v62, 0
    %v101 = vsel %vm87, %v27, 0
    %v104 = vsel %vm87, %v28, 0
    %v107 = vsel %vm87, %v29, 0
    %v110 = vsel %vm87, %v30, 0
    %v113 = vsel %vm87, %v31, 0
    %v116 = vsel %vm87, %v32, 0
    %v119 = vsel %vm87, %v33, 0
    %v122 = vsel %vm87, %v34, 0
    %v125 = vsel %vm87, %v35, 0
    %v128 = vsel %vm87, %v36, 0
    %v131 = vsel %vm87, %v37, 0
    %v134 = vsel %vm87, %v38, 0
    %v137 = vsel %vm87, %v39, 0
    %v140 = vsel %vm87, %v40, 0
    %v143 = vsel %vm87, %v41, 0
    %v146 = vsel %vm87, %v42, 0
    %v149 = vsel %vm87, %v43, 0
    %v152 = vsel %vm87, %v44, 0
    %v155 = vsel %vm87, %v45, 0
    %v158 = vsel %vm87, %v46, 0
    %v161 = vsel %vm87, %v47, 0
    %v164 = vsel %vm87, %v48, 0
    %v167 = vsel %vm87, %v49, 0
    %v170 = vsel %vm87, %v50, 0
    %v173 = vsel %vm87, %v51, 0
    %v176 = vsel %vm87, %v52, 0
    %v179 = vsel %vm87, %v53, 0
    %v182 = vsel %vm87, %v54, 0
    %v185 = vsel %vm87, %v55, 0
    %v188 = vsel %vm87, %v56, 0
    %v191 = vsel %vm87, %v57, 0
    %v194 = vsel %vm87, %v58, 0
    %196 = vmatpush.xpose.msra.mxu0 %v146
    %197 = vmatpush.xpose.msra.mxu0 %v143
    %198 = vmatpush.xpose.msra.mxu0 %v140
    %199 = vmatpush.xpose.msra.mxu0 %v137
    %200 = vmatpush.xpose.msra.mxu0 %v134
    %201 = vmatpush.xpose.msra.mxu0 %v131
    %202 = vmatpush.xpose.msra.mxu0 %v128
    %203 = vmatpush.xpose.msra.mxu0 %v125
    %204 = vmatpush.xpose.msra.mxu0 %v122
    %205 = vmatpush.xpose.msra.mxu0 %v119
    %206 = vmatpush.xpose.msra.mxu0 %v116
    %207 = vmatpush.xpose.msra.mxu0 %v113
    %208 = vmatpush.xpose.msra.mxu0 %v110
    %209 = vmatpush.xpose.msra.mxu0 %v107
    %210 = vmatpush.xpose.msra.mxu0 %v104
    %211 = vmatpush.xpose.msra.mxu0 %v101
    %212 = vmatmul.f32.gmra.mxu0 %v89
    %v213 = vpop.f32.mrf.mxu0
    %v214 = vadd.f32 %v70, %v213
    %215 = vmatmul.f32.gmra.mxu0 %v92
    %v216 = vpop.f32.mrf.mxu0
    %v217 = vadd.f32 %v75, %v216
    %218 = vmatmul.f32.gmra.mxu0 %v95
    %v219 = vpop.f32.mrf.mxu0
    %v220 = vadd.f32 %v80, %v219
    %221 = vmatmul.f32.gmra.mxu0 %v98
    %v222 = vpop.f32.mrf.mxu0
    %v223 = vadd.f32 %v85, %v222
    %224 = vdwg.mxu0
    %225 = vmatpush.xpose.msra.mxu0 %v194
    %226 = vmatpush.xpose.msra.mxu0 %v191
    %227 = vmatpush.xpose.msra.mxu0 %v188
    %228 = vmatpush.xpose.msra.mxu0 %v185
    %229 = vmatpush.xpose.msra.mxu0 %v182
    %230 = vmatpush.xpose.msra.mxu0 %v179
    %231 = vmatpush.xpose.msra.mxu0 %v176
    %232 = vmatpush.xpose.msra.mxu0 %v173
    %233 = vmatpush.xpose.msra.mxu0 %v170
    %234 = vmatpush.xpose.msra.mxu0 %v167
    %235 = vmatpush.xpose.msra.mxu0 %v164
    %236 = vmatpush.xpose.msra.mxu0 %v161
    %237 = vmatpush.xpose.msra.mxu0 %v158
    %238 = vmatpush.xpose.msra.mxu0 %v155
    %239 = vmatpush.xpose.msra.mxu0 %v152
    %240 = vmatpush.xpose.msra.mxu0 %v149
    %241 = vmatmul.f32.gmra.mxu0 %v89
    %v242 = vpop.f32.mrf.mxu0
    %v243 = vadd.f32 %v70, %v242
    %244 = vmatmul.f32.gmra.mxu0 %v92
    %v245 = vpop.f32.mrf.mxu0
    %v246 = vadd.f32 %v75, %v245
    %247 = vmatmul.f32.gmra.mxu0 %v95
    %v248 = vpop.f32.mrf.mxu0
    %v249 = vadd.f32 %v80, %v248
    %250 = vmatmul.f32.gmra.mxu0 %v98
    %v251 = vpop.f32.mrf.mxu0
    %v252 = vadd.f32 %v85, %v251
    %253 = vdwg.mxu0
    %v254 = vmax.f32 %v214, 0.0
    %v255 = vmax.f32 %v243, 0.0
    %v256 = vmax.f32 %v217, 0.0
    %v257 = vmax.f32 %v246, 0.0
    %v258 = vmax.f32 %v220, 0.0
    %v259 = vmax.f32 %v249, 0.0
    %v260 = vmax.f32 %v223, 0.0
    %v261 = vmax.f32 %v252, 0.0
    %v262 = vld [vmem:[%s3] sm:$0xff]
    %v263 = vld [vmem:[%s3 + $0x8] sm:$0xff]
    %v264 = vld [vmem:[%s3 + $0x10] sm:$0xff]
    %v265 = vld [vmem:[%s3 + $0x18] sm:$0xff]
    %v266 = vld [vmem:[%s4] sm:$0xff]
    %v267 = vld [vmem:[%s4 + $0x8] sm:$0xff]
    %v268 = vld [vmem:[%s4 + $0x10] sm:$0xff]
    %v269 = vld [vmem:[%s4 + $0x18] sm:$0xff]
    %271 = vset.pattern.permute.xlu0 0
    %272 = vperm.xlu0 %271, %v266
    %v273 = vpop.permute.xlu0 %272
    %276 = vset.pattern.permute.xlu0 0
    %277 = vperm.xlu0 %276, %v267
    %v278 = vpop.permute.xlu0 %277
    %281 = vset.pattern.permute.xlu0 0
    %282 = vperm.xlu0 %281, %v268
    %v283 = vpop.permute.xlu0 %282
    %286 = vset.pattern.permute.xlu0 0
    %287 = vperm.xlu0 %286, %v269
    %v288 = vpop.permute.xlu0 %287
    %vm290 = vcmask 261120
    %v292 = vsel %vm290, %v262, 0
    %v295 = vsel %vm290, %v263, 0
    %v298 = vsel %vm290, %v264, 0
    %v301 = vsel %vm290, %v265, 0
    %303 = vmatpush.msra.mxu0 0.0
    %304 = vmatpush.msra.mxu0 0.0
    %305 = vmatpush.msra.mxu0 0.0
    %306 = vmatpush.msra.mxu0 0.0
    %307 = vmatpush.msra.mxu0 0.0
    %308 = vmatpush.msra.mxu0 0.0
    %309 = vmatpush.msra.mxu0 0.0
    %310 = vmatpush.msra.mxu0 0.0
    %311 = vmatpush.msra.mxu0 0.0
    %312 = vmatpush.msra.mxu0 0.0
    %313 = vmatpush.msra.mxu0 0.0
    %314 = vmatpush.msra.mxu0 0.0
    %315 = vmatpush.msra.mxu0 %v260
    %316 = vmatpush.msra.mxu0 %v258
    %317 = vmatpush.msra.mxu0 %v256
    %318 = vmatpush.msra.mxu0 %v254
    %319 = vmatmul.f32.gmra.mxu0 %v292
    %v320 = vpop.f32.mrf.mxu0
    %v321 = vadd.f32 %v273, %v320
    %322 = vmatmul.f32.gmra.mxu0 %v295
    %v323 = vpop.f32.mrf.mxu0
    %v324 = vadd.f32 %v278, %v323
    %325 = vmatmul.f32.gmra.mxu0 %v298
    %v326 = vpop.f32.mrf.mxu0
    %v327 = vadd.f32 %v283, %v326
    %328 = vmatmul.f32.gmra.mxu0 %v301
    %v329 = vpop.f32.mrf.mxu0
    %v330 = vadd.f32 %v288, %v329
    %331 = vdwg.mxu0
    %332 = vmatpush.msra.mxu0 0.0
    %333 = vmatpush.msra.mxu0 0.0
    %334 = vmatpush.msra.mxu0 0.0
    %335 = vmatpush.msra.mxu0 0.0
    %336 = vmatpush.msra.mxu0 0.0
    %337 = vmatpush.msra.mxu0 0.0
    %338 = vmatpush.msra.mxu0 0.0
    %339 = vmatpush.msra.mxu0 0.0
    %340 = vmatpush.msra.mxu0 0.0
    %341 = vmatpush.msra.mxu0 0.0
    %342 = vmatpush.msra.mxu0 0.0
    %343 = vmatpush.msra.mxu0 0.0
    %344 = vmatpush.msra.mxu0 %v261
    %345 = vmatpush.msra.mxu0 %v259
    %346 = vmatpush.msra.mxu0 %v257
    %347 = vmatpush.msra.mxu0 %v255
    %348 = vmatmul.f32.gmra.mxu0 %v292
    %v349 = vpop.f32.mrf.mxu0
    %v350 = vadd.f32 %v273, %v349
    %351 = vmatmul.f32.gmra.mxu0 %v295
    %v352 = vpop.f32.mrf.mxu0
    %v353 = vadd.f32 %v278, %v352
    %354 = vmatmul.f32.gmra.mxu0 %v298
    %v355 = vpop.f32.mrf.mxu0
    %v356 = vadd.f32 %v283, %v355
    %357 = vmatmul.f32.gmra.mxu0 %v301
    %v358 = vpop.f32.mrf.mxu0
    %v359 = vadd.f32 %v288, %v358
    %360 = vdwg.mxu0
    %v361 = vmax.f32 %v321, 0.0
    %v362 = vmax.f32 %v350, 0.0
    %v363 = vmax.f32 %v324, 0.0
    %v364 = vmax.f32 %v353, 0.0
    %v365 = vmax.f32 %v327, 0.0
    %v366 = vmax.f32 %v356, 0.0
    %v367 = vmax.f32 %v330, 0.0
    %v368 = vmax.f32 %v359, 0.0
    %v369 = vld [vmem:[%s5] sm:$0xf]
    %v370 = vld [vmem:[%s6] sm:$0xf]
    %372 = vset.pattern.permute.xlu0 0
    %373 = vperm.xlu0 %372, %v370
    %v374 = vpop.permute.xlu0 %373
    %v377 = vsel %vm290, %v369, 0
    %379 = vmatpush.msra.mxu0 0.0
    %380 = vmatpush.msra.mxu0 0.0
    %381 = vmatpush.msra.mxu0 0.0
    %382 = vmatpush.msra.mxu0 0.0
    %383 = vmatpush.msra.mxu0 0.0
    %384 = vmatpush.msra.mxu0 0.0
    %385 = vmatpush.msra.mxu0 0.0
    %386 = vmatpush.msra.mxu0 0.0
    %387 = vmatpush.msra.mxu0 0.0
    %388 = vmatpush.msra.mxu0 0.0
    %389 = vmatpush.msra.mxu0 0.0
    %390 = vmatpush.msra.mxu0 0.0
    %391 = vmatpush.msra.mxu0 %v367
    %392 = vmatpush.msra.mxu0 %v365
    %393 = vmatpush.msra.mxu0 %v363
    %394 = vmatpush.msra.mxu0 %v361
    %395 = vmatmul.f32.gmra.mxu0 %v377
    %v396 = vpop.f32.mrf.mxu0
    %v397 = vadd.f32 %v374, %v396
    %398 = vdwg.mxu0
    %399 = vmatpush.msra.mxu0 0.0
    %400 = vmatpush.msra.mxu0 0.0
    %401 = vmatpush.msra.mxu0 0.0
    %402 = vmatpush.msra.mxu0 0.0
    %403 = vmatpush.msra.mxu0 0.0
    %404 = vmatpush.msra.mxu0 0.0
    %405 = vmatpush.msra.mxu0 0.0
    %406 = vmatpush.msra.mxu0 0.0
    %407 = vmatpush.msra.mxu0 0.0
    %408 = vmatpush.msra.mxu0 0.0
    %409 = vmatpush.msra.mxu0 0.0
    %410 = vmatpush.msra.mxu0 0.0
    %411 = vmatpush.msra.mxu0 %v368
    %412 = vmatpush.msra.mxu0 %v366
    %413 = vmatpush.msra.mxu0 %v364
    %414 = vmatpush.msra.mxu0 %v362
    %415 = vmatmul.f32.gmra.mxu0 %v377
    %v416 = vpop.f32.mrf.mxu0
    %v417 = vadd.f32 %v374, %v416
    %418 = vdwg.mxu0
    %vm419 = vcmask 1043456
    %v420 = vsel %vm419, %v397, -inf
    %v421 = vrot.slane %v420, 4
    %v422 = vmax.f32 %v420, %v421
    %v423 = vrot.slane %v422, 2
    %v424 = vmax.f32 %v422, %v423
    %v425 = vrot.slane %v424, 1
    %v426 = vmax.f32 %v424, %v425
    %v427 = vsel %vm419, %v417, -inf
    %v428 = vrot.slane %v427, 4
    %v429 = vmax.f32 %v427, %v428
    %v430 = vrot.slane %v429, 2
    %v431 = vmax.f32 %v429, %v430
    %v432 = vrot.slane %v431, 1
    %v433 = vmax.f32 %v431, %v432
    %v434 = vsub.f32 %v397, %v426
    %v435 = vsub.f32 %v417, %v433
    %v436 = vmul.f32 %v434, 1.442695
    %v437 = vpow.pop %v436
    %v438 = vmul.f32 %v435, 1.442695
    %v439 = vpow.pop %v438
    %v440 = vsel %vm419, %v437, 0.0
    %v441 = vrot.slane %v440, 4
    %v442 = vadd.f32 %v440, %v441
    %v443 = vrot.slane %v442, 2
    %v444 = vadd.f32 %v442, %v443
    %v445 = vrot.slane %v444, 1
    %v446 = vadd.f32 %v444, %v445
    %v447 = vsel %vm419, %v439, 0.0
    %v448 = vrot.slane %v447, 4
    %v449 = vadd.f32 %v447, %v448
    %v450 = vrot.slane %v449, 2
    %v451 = vadd.f32 %v449, %v450
    %v452 = vrot.slane %v451, 1
    %v453 = vadd.f32 %v451, %v452
    %v454 = vrcp.pop %v446
    %v455 = vmul.f32 %v446, %v454
    %v456 = vsub.f32 1.0, %v455
    %v457 = vmul.f32 %v454, %v456
    %v458 = vadd.f32 %v454, %v457
    %vm459 = vweird.f32 %v446
    %vm460 = vweird.f32 %v454
    %vm461 = vmor %vm459, %vm460
    %v462 = vsel %vm461, %v454, %v458
    %v463 = vand.u32 2147483647, %v446
    %vm464 = vcmp.eq.f32.partialorder %v463, 8.507059e+37
    %v465 = vand.u32 %v446, 2147483648
    %v466 = vor.u32 1.1754944e-38, %v465
    %v467 = vsel %vm464, %v466, %v462
    %v468 = vmul.f32 %v437, %v467
    %v469 = vrcp.pop %v453
    %v470 = vmul.f32 %v453, %v469
    %v471 = vsub.f32 1.0, %v470
    %v472 = vmul.f32 %v469, %v471
    %v473 = vadd.f32 %v469, %v472
    %vm474 = vweird.f32 %v453
    %vm475 = vweird.f32 %v469
    %vm476 = vmor %vm474, %vm475
    %v477 = vsel %vm476, %v469, %v473
    %v478 = vand.u32 2147483647, %v453
    %vm479 = vcmp.eq.f32.partialorder %v478, 8.507059e+37
    %v480 = vand.u32 %v453, 2147483648
    %v481 = vor.u32 1.1754944e-38, %v480
    %v482 = vsel %vm479, %v481, %v477
    %v483 = vmul.f32 %v439, %v482
    %v486 = vrot.slane %v483, 4
    %v487 = vsel %vm419, %v468, %v486
    %489 = vst [vmem:[#allocation2] sm:$0xff] %v487
    // Predicated region
    $region30: #{actor_probs_t.1} parent=1 // pred_check
      _
    $region31: #{actor_probs_t.1} parent=1 // pred_check_branch
      %491 = sbr.rel (0) target = $region33
    $region32: #{actor_probs_t.1} parent=1 // pred_region
      %493 = vsyncadd [#allocation3], 0
      %s495 = sshll.u32 [#allocation2], 4
      %s496 = int_to_ptr.vmem [resolvable:$true] %s495
      %s497 = sshll.u32 %s7, 4
      %s498 = int_to_ptr.hbm [resolvable:$true] %s497
      %500 = dma.vmem_to_hbm [thread:$0]  %s496, 128, %s498, [#allocation3]
    $region33: #{actor_probs_t.1} parent=1 // pred_fallthru
      _
    // Predicated region
    $region34: #{actor_probs_t.1} parent=1 // pred_check
      _
    $region35: #{actor_probs_t.1} parent=1 // pred_check_branch
      %502 = sbr.rel (0) target = $region37
    $region36: #{actor_probs_t.1} parent=1 // pred_region
      %504 = dma.done [#allocation3], 128
    $region37: #{actor_probs_t.1} parent=1 // pred_fallthru
      _
    %505 = vsyncpa [#allocation3], 1

</llo_original>
